<compile_context>
chip_gen: v5e
topology: v5e:2x2
jax: 0.10.0
libtpu: 0.0.40
codegen_flags: <defaults>
</compile_context>

<pallas_src>
import functools

import jax
import jax.numpy as jnp
from jax.experimental import pallas as pl
from jax.experimental.pallas import tpu as pltpu

_LANES = 128
_SUBLANES = 8
# Conservative per-call VMEM tile budget: comfortably inside v7x's 64 MiB
# physical / 32 MiB scoped default, and v5e's raised scoped limit.
_VMEM_BUDGET = 24 * 1024 * 1024


def _round_up(x, m):
    return ((x + m - 1) // m) * m


# -----------------------------------------------------------------------------
# Kernel: (tm, dim) x-tile @ (dim, tn) weight-tile -> (tm, tn) output tile.
# Weight is pre-transposed + lane-padded, so this is a pure MXU push with fp32
# accumulation and full-width (128-lane) output stores.
# -----------------------------------------------------------------------------
def _linear_kernel(x_ref, w_ref, b_ref, o_ref):
    acc = jnp.dot(x_ref[...], w_ref[...], preferred_element_type=jnp.float32)
    o_ref[...] = (acc + b_ref[...]).astype(o_ref.dtype)


def prepare_classifier_params(weight, bias, compute_dtype=None):
    """One-time parameter prep (hoisted out of the forward path).

    weight: [n_way, dim] (PyTorch nn.Linear layout), bias: [n_way].
    Returns w_pad_t: [dim, n_pad] and b_pad: [1, n_pad] with
    n_pad = round_up(n_way, 128); padded columns are zero.
    """
    n_way, dim = weight.shape
    n_pad = _round_up(max(n_way, 1), _LANES)
    if compute_dtype is not None:
        weight = weight.astype(compute_dtype)
    w_pad_t = jnp.zeros((dim, n_pad), dtype=weight.dtype).at[:, :n_way].set(weight.T)
    # Bias add stays fp32 (v5e has no bf16 VPU).
    b_pad = jnp.zeros((1, n_pad), dtype=jnp.float32).at[0, :n_way].set(
        bias.astype(jnp.float32))
    return w_pad_t, b_pad


def _choose_tn(dim, n_pad, itemsize):
    # Keep the weight fully resident when it fits; otherwise stream N tiles.
    for tn in (n_pad, 2048, 1024, 512, 256, 128):
        if tn <= n_pad and n_pad % tn == 0:
            nbuf = 1 if tn == n_pad else 2
            if dim * tn * itemsize * nbuf <= _VMEM_BUDGET // 2:
                return tn
    return _LANES


def _choose_tm(B, dim, tn, weight_buf_bytes, x_itemsize, out_itemsize):
    avail = max(_VMEM_BUDGET - weight_buf_bytes, 2 * 1024 * 1024)
    per_row = 2 * dim * x_itemsize + 2 * tn * out_itemsize  # double-buffered x + out
    tm = (avail // per_row) // _SUBLANES * _SUBLANES
    return max(_SUBLANES, min(tm, 1024, _round_up(B, _SUBLANES)))


def _batch_axis_semantics(grid_m):
    # Only CORE_PARALLEL actually shards a grid axis across v7x's two
    # TensorCores; PARALLEL is the safe choice on single-TC v5e/v6e.
    try:
        kind = jax.devices()[0].device_kind.lower()
    except Exception:
        kind = ""
    if ("v7" in kind or "7x" in kind) and grid_m >= 2 and grid_m % 2 == 0:
        return pltpu.CORE_PARALLEL
    return pltpu.PARALLEL


@functools.partial(jax.jit, static_argnames=("n_way",))
def classifier_forward(x, w_pad_t, b_pad, n_way):
    """y = x @ weight.T + bias (nn.Linear semantics) with pre-padded params.

    x: [..., dim]; w_pad_t: [dim, n_pad]; b_pad: [1, n_pad]. Returns [..., n_way].
    """
    *lead, dim = x.shape
    n_pad = w_pad_t.shape[1]

    x2 = x.reshape(-1, dim)
    if x2.dtype != w_pad_t.dtype:
        x2 = x2.astype(w_pad_t.dtype)  # optional bf16 compute path
    B = x2.shape[0]
    x_isz = jnp.dtype(x2.dtype).itemsize
    out_dtype = x.dtype
    out_isz = jnp.dtype(out_dtype).itemsize

    tn = _choose_tn(dim, n_pad, x_isz)
    grid_n = n_pad // tn
    weight_buf_bytes = dim * tn * x_isz * (1 if grid_n == 1 else 2)
    tm = _choose_tm(B, dim, tn, weight_buf_bytes, x_isz, out_isz)
    grid_m = pl.cdiv(B, tm)

    # Constant-index (fully resident) weight/bias: single buffer, no wasted VMEM.
    wb_kwargs = {"pipeline_mode": pl.Buffered(1)} if grid_n == 1 else {}

    used = (weight_buf_bytes
            + (1 if grid_n == 1 else 2) * _SUBLANES * tn * 4        # bias (sublane-padded)
            + 2 * tm * dim * x_isz                                  # x, double-buffered
            + 2 * tm * tn * out_isz)                                # out, double-buffered
    vmem_limit = int(min(48 * 1024 * 1024, max(16 * 1024 * 1024, 2 * used)))

    cost = pl.CostEstimate(
        flops=2 * B * dim * n_pad,
        transcendentals=0,
        bytes_accessed=(B * dim + dim * n_pad) * x_isz + n_pad * 4 + B * n_pad * out_isz,
    )

    out_padded = pl.pallas_call(
        _linear_kernel,
        out_shape=jax.ShapeDtypeStruct((B, n_pad), out_dtype),
        grid_spec=pltpu.PrefetchScalarGridSpec(
            num_scalar_prefetch=0,
            grid=(grid_m, grid_n),
            in_specs=[
                pl.BlockSpec((tm, dim), lambda i, j: (i, 0)),               # x (reused across j)
                pl.BlockSpec((dim, tn), lambda i, j: (0, j), **wb_kwargs),  # weight [K, N]
                pl.BlockSpec((1, tn), lambda i, j: (0, j), **wb_kwargs),    # bias
            ],
            out_specs=pl.BlockSpec((tm, tn), lambda i, j: (i, j)),
        ),
        compiler_params=pltpu.CompilerParams(
            dimension_semantics=(_batch_axis_semantics(grid_m), pltpu.ARBITRARY),
            vmem_limit_bytes=vmem_limit,
        ),
        cost_estimate=cost,
    )(x2, w_pad_t, b_pad)

    # Padded output lanes are exactly zero; slice them off.
    out = out_padded[:, :n_way]
    return out.reshape(*lead, n_way)


if __name__ == "__main__":
    key = jax.random.PRNGKey(0)
    k_x, k_w, k_b = jax.random.split(key, 3)

    B, dim, n_way = 8, 32, 5

    x = jax.random.normal(k_x, (B, dim), dtype=jnp.float32)
    # Deterministic parameter init (roughly PyTorch's default uniform init).
    bound = 1.0 / (dim ** 0.5)
    weight = jax.random.uniform(k_w, (n_way, dim), minval=-bound, maxval=bound,
                                dtype=jnp.float32)
    bias = jax.random.uniform(k_b, (n_way,), minval=-bound, maxval=bound,
                              dtype=jnp.float32)

    # One-time parameter prep (pad + transpose), hoisted out of the forward path.
    w_pad_t, b_pad = prepare_classifier_params(weight, bias)
    w_pad_t, b_pad = jax.block_until_ready((w_pad_t, b_pad))

    out = classifier_forward(x, w_pad_t, b_pad, n_way)
    out = jax.block_until_ready(out)

    # Reference check against plain JAX (nn.Linear semantics).
    ref = x @ weight.T + bias
    assert out.shape == (B, n_way)
    assert jnp.allclose(out, ref, atol=1e-5, rtol=1e-5)

    print("KERNEL_OK")
</pallas_src>

<mosaic_0001>
module attributes {stable_mosaic.version = 11 : i64} {
  func.func @_linear_kernel(%arg0: i32, %arg1: i32, %arg2: memref<8x32xf32, #tpu.memory_space<vmem>>, %arg3: memref<32x128xf32, #tpu.memory_space<vmem>>, %arg4: memref<1x128xf32, #tpu.memory_space<vmem>>, %arg5: memref<8x128xf32, #tpu.memory_space<vmem>>) attributes {dimension_semantics = [#tpu.dimension_semantics<parallel>, #tpu.dimension_semantics<arbitrary>], iteration_bounds = array<i64: 1, 1>, scalar_prefetch = 0 : i64, scratch_operands = 0 : i64, tpu.core_type = #tpu.core_type<tc>, window_params = [{transform_indices = @transform_0, window_bounds = array<i64: 8, 32>}, {pipeline_mode = #tpu.pipeline_mode<synchronous>, transform_indices = @transform_1, window_bounds = array<i64: 32, 128>}, {pipeline_mode = #tpu.pipeline_mode<synchronous>, transform_indices = @transform_2, window_bounds = array<i64: 1, 128>}, {transform_indices = @transform_3, window_bounds = array<i64: 8, 128>}]} {
    %c0 = arith.constant 0 : index
    %c0_0 = arith.constant 0 : index
    %0 = vector.load %arg2[%c0, %c0_0] : memref<8x32xf32, #tpu.memory_space<vmem>>, vector<8x32xf32>
    %c0_1 = arith.constant 0 : index
    %c0_2 = arith.constant 0 : index
    %1 = vector.load %arg3[%c0_1, %c0_2] : memref<32x128xf32, #tpu.memory_space<vmem>>, vector<32x128xf32>
    %cst = arith.constant dense<0.000000e+00> : vector<8x128xf32>
    %2 = tpu.matmul %0, %1, %cst {dimension_numbers = #tpu.dot_dimension_numbers<[1], [0], [0], [1], [0, 0, 1, 1], [], []>} : vector<8x32xf32>, vector<32x128xf32>, vector<8x128xf32> -> vector<8x128xf32>
    %c0_3 = arith.constant 0 : index
    %c0_4 = arith.constant 0 : index
    %3 = vector.load %arg4[%c0_3, %c0_4] : memref<1x128xf32, #tpu.memory_space<vmem>>, vector<1x128xf32>
    %4 = vector.broadcast %3 : vector<1x128xf32> to vector<8x128xf32>
    %5 = arith.addf %2, %4 : vector<8x128xf32>
    %c0_5 = arith.constant 0 : index
    %c0_6 = arith.constant 0 : index
    %6 = vector.load %arg5[%c0_5, %c0_6] : memref<8x128xf32, #tpu.memory_space<vmem>>, vector<8x128xf32>
    tpu.vector_store %arg5[%c0_5, %c0_6], %5 {strides = array<i32>} : memref<8x128xf32, #tpu.memory_space<vmem>>, vector<8x128xf32>,
    return
  }
  func.func @transform_0(%arg0: i32, %arg1: i32) -> (i32, i32) {
    %c0_i32 = arith.constant 0 : i32
    %c0_i32_0 = arith.constant 0 : i32
    return %arg0, %c0_i32 : i32, i32
  }
  func.func @transform_1(%arg0: i32, %arg1: i32) -> (i32, i32) {
    %c0_i32 = arith.constant 0 : i32
    %c0_i32_0 = arith.constant 0 : i32
    return %c0_i32, %arg1 : i32, i32
  }
  func.func @transform_2(%arg0: i32, %arg1: i32) -> (i32, i32) {
    %c0_i32 = arith.constant 0 : i32
    %c0_i32_0 = arith.constant 0 : i32
    return %c0_i32, %arg1 : i32, i32
  }
  func.func @transform_3(%arg0: i32, %arg1: i32) -> (i32, i32) {
    %c0_i32 = arith.constant 0 : i32
    return %arg0, %arg1 : i32, i32
  }
}

</mosaic_0001>

<llo_original>
// kernel: classifier_forward.1
$region0: #{classifier_forward.1}
  #allocation0 [shape = 'u32[]', space=smem, size = 0x4, offset = 0x4, fixed_abs, tag = 'smem constant byte address 0x4 - core index']
  #allocation1 [shape = 'u32[72,128]{1,0:T(1,128)}', space=vmem, size = 0x9000, scoped, tag = 'internal scratch']
  %s0 = inlined_call_operand.hbm [shape: f32[8,32], index: 0, kind: input, shape index: {}]
  %s1 = inlined_call_operand.hbm [shape: f32[32,128], index: 1, kind: input, shape index: {}]
  %s2 = inlined_call_operand.vmem [shape: f32[1,128], index: 2, kind: input, shape index: {}]
  %s3 = inlined_call_operand.hbm [shape: f32[8,128], index: 3, kind: output, shape index: {}]
  %s4 = sld [smem:[#allocation0]]
  $region30: #{classifier_forward.1} parent=0
    _
  %s6 = ssub.s32 1, %s4
  %s7 = scalar_select 0, %s6, %s4
  $region1: #{classifier_forward.1} parent=0
    #allocation2 [shape = 'u8[4096]{0}', space=vmem, size = 0x1000, scoped, tag = 'input window, operand 0, single buffered']
    #allocation3 [shape = 's32[1]{0}', space=sflag, size = 0x4, scoped, tag = 'scoped memory for classifier_forward.1']
    #allocation4 [shape = 's32[1]{0}', space=sflag, size = 0x4, scoped, tag = 'scoped memory for classifier_forward.1']
    #allocation5 [shape = 'u8[16384]{0}', space=vmem, size = 0x4000, scoped, tag = 'input window, operand 1, single buffered']
    #allocation6 [shape = 's32[1]{0}', space=sflag, size = 0x4, scoped, tag = 'scoped memory for classifier_forward.1']
    #allocation7 [shape = 'u8[4096]{0}', space=vmem, size = 0x1000, scoped, tag = 'output window, operand 0, single buffered']
    %8 = vsyncpa [#allocation3], 0
    %9 = vsyncpa [#allocation6], 0
    %10 = vsyncpa [#allocation4], 0
    // Predicated region
    $region2: #{classifier_forward.1} parent=1 // pred_check
      _
    $region3: #{classifier_forward.1} parent=1 // pred_check_branch
      %12 = sbr.rel (0) target = $region5
    $region4: #{classifier_forward.1} parent=1 // pred_region
      %14 = vsyncadd [#allocation3], 0
      %s16 = sshll.u32 %s0, 4
      %s17 = int_to_ptr.hbm [resolvable:$true] %s16
      %s18 = sshll.u32 [#allocation2], 4
      %s19 = int_to_ptr.vmem [resolvable:$true] %s18
      %21 = dma.hbm_to_vmem [thread:$0]  %s17, 128, %s19, [#allocation3]
    $region5: #{classifier_forward.1} parent=1 // pred_fallthru
      _
    // Predicated region
    $region6: #{classifier_forward.1} parent=1 // pred_check
      _
    $region7: #{classifier_forward.1} parent=1 // pred_check_branch
      %23 = sbr.rel (0) target = $region9
    $region8: #{classifier_forward.1} parent=1 // pred_region
      %25 = vsyncadd [#allocation6], 0
      %s26 = sshll.u32 %s1, 4
      %s27 = int_to_ptr.hbm [resolvable:$true] %s26
      %s28 = sshll.u32 [#allocation5], 4
      %s29 = int_to_ptr.vmem [resolvable:$true] %s28
      %34 = dma.hbm_to_vmem [thread:$0]  %s27, 512, %s29, [#allocation6], 128, 128, 8
    $region9: #{classifier_forward.1} parent=1 // pred_fallthru
      _
    // Predicated region
    $region10: #{classifier_forward.1} parent=1 // pred_check
      _
    $region11: #{classifier_forward.1} parent=1 // pred_check_branch
      %36 = sbr.rel (0) target = $region13
    $region12: #{classifier_forward.1} parent=1 // pred_region
      _
    $region13: #{classifier_forward.1} parent=1 // pred_fallthru
      _
    // Predicated region
    $region14: #{classifier_forward.1} parent=1 // pred_check
      _
    $region15: #{classifier_forward.1} parent=1 // pred_check_branch
      %38 = sbr.rel (0) target = $region17
    $region16: #{classifier_forward.1} parent=1 // pred_region
      %40 = dma.done [#allocation3], 128
    $region17: #{classifier_forward.1} parent=1 // pred_fallthru
      _
    // Predicated region
    $region18: #{classifier_forward.1} parent=1 // pred_check
      _
    $region19: #{classifier_forward.1} parent=1 // pred_check_branch
      %42 = sbr.rel (0) target = $region21
    $region20: #{classifier_forward.1} parent=1 // pred_region
      %44 = dma.done [#allocation6], 512
    $region21: #{classifier_forward.1} parent=1 // pred_fallthru
      _
    %v45 = vld [vmem:[#allocation2] sm:$0xff]
    %v46 = vld [vmem:[#allocation5] sm:$0xff]
    %v47 = vld [vmem:[#allocation5 + $0x8] sm:$0xff]
    %v48 = vld [vmem:[#allocation5 + $0x10] sm:$0xff]
    %v49 = vld [vmem:[#allocation5 + $0x18] sm:$0xff]
    %v50 = vld [vmem:[%s2] sm:$0x1]
    %v52 = vperm.slane %v50, 0
    %vm54 = vcmask 261120
    %v56 = vsel %vm54, %v45, 0
    %58 = vmatpush.msra.mxu0 0.0
    %59 = vmatpush.msra.mxu0 0.0
    %60 = vmatpush.msra.mxu0 0.0
    %61 = vmatpush.msra.mxu0 0.0
    %62 = vmatpush.msra.mxu0 0.0
    %63 = vmatpush.msra.mxu0 0.0
    %64 = vmatpush.msra.mxu0 0.0
    %65 = vmatpush.msra.mxu0 0.0
    %66 = vmatpush.msra.mxu0 0.0
    %67 = vmatpush.msra.mxu0 0.0
    %68 = vmatpush.msra.mxu0 0.0
    %69 = vmatpush.msra.mxu0 0.0
    %70 = vmatpush.msra.mxu0 %v49
    %71 = vmatpush.msra.mxu0 %v48
    %72 = vmatpush.msra.mxu0 %v47
    %73 = vmatpush.msra.mxu0 %v46
    %74 = vmatmul.f32.gmra.mxu0 %v56
    %v75 = vpop.f32.mrf.mxu0
    %v76 = vadd.f32 %v52, %v75
    %77 = vdwg.mxu0
    %78 = vst [vmem:[#allocation7] sm:$0xff] %v76
    // Predicated region
    $region22: #{classifier_forward.1} parent=1 // pred_check
      _
    $region23: #{classifier_forward.1} parent=1 // pred_check_branch
      %80 = sbr.rel (0) target = $region25
    $region24: #{classifier_forward.1} parent=1 // pred_region
      %82 = vsyncadd [#allocation4], 0
      %s84 = sshll.u32 [#allocation7], 4
      %s85 = int_to_ptr.vmem [resolvable:$true] %s84
      %s86 = sshll.u32 %s3, 4
      %s87 = int_to_ptr.hbm [resolvable:$true] %s86
      %89 = dma.vmem_to_hbm [thread:$0]  %s85, 128, %s87, [#allocation4]
    $region25: #{classifier_forward.1} parent=1 // pred_fallthru
      _
    // Predicated region
    $region26: #{classifier_forward.1} parent=1 // pred_check
      _
    $region27: #{classifier_forward.1} parent=1 // pred_check_branch
      %91 = sbr.rel (0) target = $region29
    $region28: #{classifier_forward.1} parent=1 // pred_region
      %93 = dma.done [#allocation4], 128
    $region29: #{classifier_forward.1} parent=1 // pred_fallthru
      _
    %94 = vsyncpa [#allocation3], 1
    %95 = vsyncpa [#allocation6], 1
    %96 = vsyncpa [#allocation4], 1

</llo_original>
